<compile_context>
chip_gen: v7x
topology: tpu7x:2x2x1
jax: 0.10.0
libtpu: 0.0.40
codegen_flags: <defaults>
</compile_context>

<pallas_src>
import math

import jax
import jax.numpy as jnp
from jax.experimental import pallas as pl
from jax.experimental.pallas import tpu as pltpu

LANE = 128
_NEG_BIG = -1e30  # bias fill for padded class columns (vanishes in softmax)


# ----------------------------- kernels ------------------------------------


def _sage_hidden_kernel(adj_ref, xk_ref, xi_ref, wl_ref, wr_ref, b_ref,
                        o_ref, acc_ref):
    """Hidden block: SAGEConv(aggr='sum') + folded-BN + ReLU, K-tiled."""
    k = pl.program_id(1)

    @pl.when(k == 0)
    def _():
        acc_ref[...] = jnp.zeros_like(acc_ref)

    # partial sum-aggregation over this neighbour slab (bf16 in, f32 accumulate)
    acc_ref[...] += jnp.dot(adj_ref[...], xk_ref[...],
                            preferred_element_type=jnp.float32)

    @pl.when(k == pl.num_programs(1) - 1)
    def _():
        h = (jnp.dot(acc_ref[...].astype(jnp.bfloat16), wl_ref[...],
                     preferred_element_type=jnp.float32)
             + jnp.dot(xi_ref[...], wr_ref[...],
                       preferred_element_type=jnp.float32)
             + b_ref[...])
        o_ref[...] = jnp.maximum(h, 0.0).astype(o_ref.dtype)


def _sage_out_kernel(adj_ref, xk_ref, xi_ref, deg_ref, wl_ref, wr_ref, b_ref,
                     o_ref, acc_ref):
    """Last block: SAGEConv(aggr='mean') + log_softmax(dim=-1), K-tiled."""
    k = pl.program_id(1)

    @pl.when(k == 0)
    def _():
        acc_ref[...] = jnp.zeros_like(acc_ref)

    acc_ref[...] += jnp.dot(adj_ref[...], xk_ref[...],
                            preferred_element_type=jnp.float32)

    @pl.when(k == pl.num_programs(1) - 1)
    def _():
        agg = acc_ref[...] / deg_ref[...]          # mean aggregation (full-row degree)
        h = (jnp.dot(agg.astype(jnp.bfloat16), wl_ref[...],
                     preferred_element_type=jnp.float32)
             + jnp.dot(xi_ref[...], wr_ref[...],
                       preferred_element_type=jnp.float32)
             + b_ref[...])
        # numerically stable log_softmax over classes (padded cols carry -1e30 bias)
        m = jnp.max(h, axis=-1, keepdims=True)
        s = h - m
        lse = jnp.log(jnp.sum(jnp.exp(s), axis=-1, keepdims=True))
        o_ref[...] = (s - lse).astype(o_ref.dtype)


# --------------------------- pallas wrappers -------------------------------

_COMPILER_PARAMS = pltpu.CompilerParams(
    dimension_semantics=("parallel", "arbitrary"),
    vmem_limit_bytes=32 * 1024 * 1024,
)


def sage_hidden_layer(adj, x, wl, wr, b, *, tile_n, tile_k):
    Np, Fp = x.shape
    Hp = wl.shape[1]
    assert Np % tile_n == 0 and Np % tile_k == 0
    return pl.pallas_call(
        _sage_hidden_kernel,
        out_shape=jax.ShapeDtypeStruct((Np, Hp), jnp.bfloat16),
        grid_spec=pltpu.PrefetchScalarGridSpec(
            num_scalar_prefetch=0,
            grid=(Np // tile_n, Np // tile_k),
            in_specs=[
                pl.BlockSpec((tile_n, tile_k), lambda i, k: (i, k)),  # adjacency slab
                pl.BlockSpec((tile_k, Fp), lambda i, k: (k, 0)),      # X slab for A @ X
                pl.BlockSpec((tile_n, Fp), lambda i, k: (i, 0)),      # X rows for root term
                pl.BlockSpec((Fp, Hp), lambda i, k: (0, 0)),          # Wl (BN folded)
                pl.BlockSpec((Fp, Hp), lambda i, k: (0, 0)),          # Wr (BN folded)
                pl.BlockSpec((1, Hp), lambda i, k: (0, 0)),           # bias (BN folded)
            ],
            out_specs=pl.BlockSpec((tile_n, Hp), lambda i, k: (i, 0)),
            scratch_shapes=[pltpu.VMEM((tile_n, Fp), jnp.float32)],
        ),
        compiler_params=_COMPILER_PARAMS,
    )(adj, x, x, wl, wr, b)


def sage_out_layer(adj, x, deg, wl, wr, b, *, tile_n, tile_k):
    Np, Fp = x.shape
    Cp = wl.shape[1]
    assert Np % tile_n == 0 and Np % tile_k == 0
    return pl.pallas_call(
        _sage_out_kernel,
        out_shape=jax.ShapeDtypeStruct((Np, Cp), jnp.float32),
        grid_spec=pltpu.PrefetchScalarGridSpec(
            num_scalar_prefetch=0,
            grid=(Np // tile_n, Np // tile_k),
            in_specs=[
                pl.BlockSpec((tile_n, tile_k), lambda i, k: (i, k)),  # adjacency slab
                pl.BlockSpec((tile_k, Fp), lambda i, k: (k, 0)),      # X slab for A @ X
                pl.BlockSpec((tile_n, Fp), lambda i, k: (i, 0)),      # X rows for root term
                pl.BlockSpec((tile_n, 1), lambda i, k: (i, 0)),       # precomputed degree
                pl.BlockSpec((Fp, Cp), lambda i, k: (0, 0)),          # Wl
                pl.BlockSpec((Fp, Cp), lambda i, k: (0, 0)),          # Wr
                pl.BlockSpec((1, Cp), lambda i, k: (0, 0)),           # bias (-1e30 in pads)
            ],
            out_specs=pl.BlockSpec((tile_n, Cp), lambda i, k: (i, 0)),
            scratch_shapes=[pltpu.VMEM((tile_n, Fp), jnp.float32)],
        ),
        compiler_params=_COMPILER_PARAMS,
    )(adj, x, x, deg, wl, wr, b)


# --------------------------- host-side helpers -----------------------------


def _round_up(x, m):
    return (x + m - 1) // m * m


def _pad2(a, rows, cols, fill=0.0):
    r, c = a.shape
    return jnp.pad(a, ((0, rows - r), (0, cols - c)), constant_values=fill)


def _fold_bn(wl, wr, b, gamma, beta, mean, var, eps=1e-5):
    """Fold eval-mode BatchNorm1d into the SAGEConv weights/bias."""
    scale = gamma * jax.lax.rsqrt(var + eps)          # (1, H)
    return wl * scale, wr * scale, (b - mean) * scale + beta


def init_sage_params(key, in_channels, hidden_channels, out_channels, num_layers):
    """Deterministic synthetic parameters matching the module's shapes."""
    dims = [in_channels] + [hidden_channels] * (num_layers - 1) + [out_channels]
    params = {"convs": [], "bns": []}
    for li in range(num_layers):
        fin, fout = dims[li], dims[li + 1]
        key, k1, k2, k3 = jax.random.split(key, 4)
        scale = 1.0 / jnp.sqrt(jnp.float32(fin))
        wl = jax.random.normal(k1, (fin, fout), jnp.float32) * scale   # lin_l weight^T
        wr = jax.random.normal(k2, (fin, fout), jnp.float32) * scale   # lin_r weight^T
        b = jax.random.normal(k3, (1, fout), jnp.float32) * 0.1        # lin_l bias
        params["convs"].append((wl, wr, b))
        if li < num_layers - 1:
            key, k4, k5, k6, k7 = jax.random.split(key, 5)
            gamma = 1.0 + 0.1 * jax.random.normal(k4, (1, fout), jnp.float32)
            beta = 0.1 * jax.random.normal(k5, (1, fout), jnp.float32)
            mean = 0.1 * jax.random.normal(k6, (1, fout), jnp.float32)
            var = 1.0 + 0.1 * jax.random.uniform(k7, (1, fout), jnp.float32)
            params["bns"].append((gamma, beta, mean, var))
    return params


def sage_forward(params, x, adj, *, tile_n=128, tile_k=128):
    """Eval-mode forward of SAGE.  x: [N, in_channels], adj: dense [N, N] adj_t."""
    N = x.shape[0]
    Np = _round_up(N, math.lcm(tile_n, tile_k))

    adj_p = _pad2(adj.astype(jnp.float32), Np, Np)
    # full-row degree for the mean aggregation of the last layer (clamped at 1)
    deg = jnp.maximum(jnp.sum(adj_p, axis=-1, keepdims=True), 1.0)
    adj_b = adj_p.astype(jnp.bfloat16)                 # 0/1 entries -> exact in bf16

    num_layers = len(params["convs"])
    h = x.astype(jnp.float32)

    for li in range(num_layers - 1):
        wl, wr, b = params["convs"][li]
        wl_f, wr_f, b_f = _fold_bn(wl, wr, b, *params["bns"][li])
        fin, fout = wl.shape
        Fp, Hp = _round_up(fin, LANE), _round_up(fout, LANE)
        x_p = _pad2(h, Np, Fp).astype(jnp.bfloat16)
        wl_p = _pad2(wl_f, Fp, Hp).astype(jnp.bfloat16)
        wr_p = _pad2(wr_f, Fp, Hp).astype(jnp.bfloat16)
        b_p = _pad2(b_f, 1, Hp)
        h = sage_hidden_layer(adj_b, x_p, wl_p, wr_p, b_p,
                              tile_n=tile_n, tile_k=tile_k)
        # dropout: identity in eval mode

    wl, wr, b = params["convs"][-1]
    fin, C = wl.shape
    Fp, Cp = _round_up(fin, LANE), _round_up(C, LANE)
    x_p = _pad2(h, Np, Fp).astype(jnp.bfloat16)
    wl_p = _pad2(wl, Fp, Cp).astype(jnp.bfloat16)
    wr_p = _pad2(wr, Fp, Cp).astype(jnp.bfloat16)
    b_p = _pad2(b, 1, Cp, fill=_NEG_BIG)   # padded classes vanish under log_softmax
    out = sage_out_layer(adj_b, x_p, deg, wl_p, wr_p, b_p,
                         tile_n=tile_n, tile_k=tile_k)
    return out[:N, :C]


def sage_reference(params, x, adj):
    """Pure-JAX reference with the same bf16 quantisation points as the kernels."""
    def q(a):  # bf16 round-trip (what the MXU consumes)
        return a.astype(jnp.bfloat16).astype(jnp.float32)

    adj_q = q(adj)
    deg = jnp.maximum(adj.sum(-1, keepdims=True), 1.0)
    h = x
    n_layers = len(params["convs"])
    for li in range(n_layers - 1):
        wl, wr, b = params["convs"][li]
        wl_f, wr_f, b_f = _fold_bn(wl, wr, b, *params["bns"][li])
        hq = q(h)
        agg = jnp.dot(adj_q, hq, preferred_element_type=jnp.float32)
        z = (jnp.dot(q(agg), q(wl_f), preferred_element_type=jnp.float32)
             + jnp.dot(hq, q(wr_f), preferred_element_type=jnp.float32) + b_f)
        h = q(jnp.maximum(z, 0.0))
    wl, wr, b = params["convs"][-1]
    hq = q(h)
    agg = jnp.dot(adj_q, hq, preferred_element_type=jnp.float32) / deg
    z = (jnp.dot(q(agg), q(wl), preferred_element_type=jnp.float32)
         + jnp.dot(hq, q(wr), preferred_element_type=jnp.float32) + b)
    return jax.nn.log_softmax(z, axis=-1)


# ------------------------------- main ---------------------------------------


if __name__ == "__main__":
    N = 200                 # nodes (exercises row padding to 256)
    in_channels = 16
    hidden_channels = 32
    out_channels = 8
    num_layers = 3

    key = jax.random.PRNGKey(0)
    key, kx, ka, kp = jax.random.split(key, 4)

    x = jax.random.normal(kx, (N, in_channels), jnp.float32)
    # random sparse-ish binary adjacency (dense representation of adj_t)
    adj = (jax.random.uniform(ka, (N, N)) < 0.1).astype(jnp.float32)

    params = init_sage_params(kp, in_channels, hidden_channels, out_channels,
                              num_layers)

    out = sage_forward(params, x, adj, tile_n=128, tile_k=128)
    out = jax.block_until_ready(out)

    assert out.shape == (N, out_channels), out.shape
    # rows of log_softmax must exponentiate-sum to ~1
    assert jnp.allclose(jnp.exp(out).sum(-1), 1.0, atol=1e-3)
    # numerical check against a quantisation-matched pure-JAX reference
    ref = sage_reference(params, x, adj)
    err = float(jnp.max(jnp.abs(out - ref)))
    assert err < 1e-2, err
    print("KERNEL_OK")
</pallas_src>

<mosaic_0001>
module attributes {stable_mosaic.version = 11 : i64} {
  func.func @_sage_hidden_kernel(%arg0: i32, %arg1: i32, %arg2: memref<128x128xbf16, #tpu.memory_space<vmem>>, %arg3: memref<128x128xbf16, #tpu.memory_space<vmem>>, %arg4: memref<128x128xbf16, #tpu.memory_space<vmem>>, %arg5: memref<128x128xbf16, #tpu.memory_space<vmem>>, %arg6: memref<128x128xbf16, #tpu.memory_space<vmem>>, %arg7: memref<1x128xf32, #tpu.memory_space<vmem>>, %arg8: memref<128x128xbf16, #tpu.memory_space<vmem>>, %arg9: memref<128x128xf32, #tpu.memory_space<vmem>>) attributes {dimension_semantics = [#tpu.dimension_semantics<parallel>, #tpu.dimension_semantics<arbitrary>], iteration_bounds = array<i64: 2, 2>, scalar_prefetch = 0 : i64, scratch_operands = 1 : i64, tpu.core_type = #tpu.core_type<tc>, window_params = [{transform_indices = @transform_0, window_bounds = array<i64: 128, 128>}, {transform_indices = @transform_1, window_bounds = array<i64: 128, 128>}, {transform_indices = @transform_2, window_bounds = array<i64: 128, 128>}, {pipeline_mode = #tpu.pipeline_mode<synchronous>, transform_indices = @transform_3, window_bounds = array<i64: 128, 128>}, {pipeline_mode = #tpu.pipeline_mode<synchronous>, transform_indices = @transform_4, window_bounds = array<i64: 128, 128>}, {pipeline_mode = #tpu.pipeline_mode<synchronous>, transform_indices = @transform_5, window_bounds = array<i64: 1, 128>}, {transform_indices = @transform_6, window_bounds = array<i64: 128, 128>}]} {
    %c0_i32 = arith.constant 0 : i32
    %0 = arith.cmpi eq, %arg1, %c0_i32 : i32
    %1 = arith.extui %0 : i1 to i32
    %c0_i32_0 = arith.constant 0 : i32
    %2 = arith.cmpi ne, %1, %c0_i32_0 : i32
    scf.if %2 {
      %cst_9 = arith.constant 0.000000e+00 : f32
      %12 = vector.broadcast %cst_9 : f32 to vector<128x128xf32>
      %c0_10 = arith.constant 0 : index
      %c0_11 = arith.constant 0 : index
      %13 = vector.load %arg9[%c0_10, %c0_11] : memref<128x128xf32, #tpu.memory_space<vmem>>, vector<128x128xf32>
      tpu.vector_store %arg9[%c0_10, %c0_11], %12 {strides = array<i32>} : memref<128x128xf32, #tpu.memory_space<vmem>>, vector<128x128xf32>,
    } else {
    }
    %c0 = arith.constant 0 : index
    %c0_1 = arith.constant 0 : index
    %3 = vector.load %arg9[%c0, %c0_1] : memref<128x128xf32, #tpu.memory_space<vmem>>, vector<128x128xf32>
    %c0_2 = arith.constant 0 : index
    %c0_3 = arith.constant 0 : index
    %4 = vector.load %arg2[%c0_2, %c0_3] : memref<128x128xbf16, #tpu.memory_space<vmem>>, vector<128x128xbf16>
    %c0_4 = arith.constant 0 : index
    %c0_5 = arith.constant 0 : index
    %5 = vector.load %arg3[%c0_4, %c0_5] : memref<128x128xbf16, #tpu.memory_space<vmem>>, vector<128x128xbf16>
    %cst = arith.constant dense<0.000000e+00> : vector<128x128xf32>
    %6 = tpu.matmul %4, %5, %cst {dimension_numbers = #tpu.dot_dimension_numbers<[1], [0], [0], [1], [0, 0, 1, 1], [], []>} : vector<128x128xbf16>, vector<128x128xbf16>, vector<128x128xf32> -> vector<128x128xf32>
    %7 = arith.addf %3, %6 : vector<128x128xf32>
    %c0_6 = arith.constant 0 : index
    %c0_7 = arith.constant 0 : index
    %8 = vector.load %arg9[%c0_6, %c0_7] : memref<128x128xf32, #tpu.memory_space<vmem>>, vector<128x128xf32>
    tpu.vector_store %arg9[%c0_6, %c0_7], %7 {strides = array<i32>} : memref<128x128xf32, #tpu.memory_space<vmem>>, vector<128x128xf32>,
    %c1_i32 = arith.constant 1 : i32
    %9 = arith.cmpi eq, %arg1, %c1_i32 : i32
    %10 = arith.extui %9 : i1 to i32
    %c0_i32_8 = arith.constant 0 : i32
    %11 = arith.cmpi ne, %10, %c0_i32_8 : i32
    scf.if %11 {
      %c0_9 = arith.constant 0 : index
      %c0_10 = arith.constant 0 : index
      %12 = vector.load %arg9[%c0_9, %c0_10] : memref<128x128xf32, #tpu.memory_space<vmem>>, vector<128x128xf32>
      %13 = arith.truncf %12 : vector<128x128xf32> to vector<128x128xbf16>
      %c0_11 = arith.constant 0 : index
      %c0_12 = arith.constant 0 : index
      %14 = vector.load %arg5[%c0_11, %c0_12] : memref<128x128xbf16, #tpu.memory_space<vmem>>, vector<128x128xbf16>
      %cst_13 = arith.constant dense<0.000000e+00> : vector<128x128xf32>
      %15 = tpu.matmul %13, %14, %cst_13 {dimension_numbers = #tpu.dot_dimension_numbers<[1], [0], [0], [1], [0, 0, 1, 1], [], []>} : vector<128x128xbf16>, vector<128x128xbf16>, vector<128x128xf32> -> vector<128x128xf32>
      %c0_14 = arith.constant 0 : index
      %c0_15 = arith.constant 0 : index
      %16 = vector.load %arg4[%c0_14, %c0_15] : memref<128x128xbf16, #tpu.memory_space<vmem>>, vector<128x128xbf16>
      %c0_16 = arith.constant 0 : index
      %c0_17 = arith.constant 0 : index
      %17 = vector.load %arg6[%c0_16, %c0_17] : memref<128x128xbf16, #tpu.memory_space<vmem>>, vector<128x128xbf16>
      %cst_18 = arith.constant dense<0.000000e+00> : vector<128x128xf32>
      %18 = tpu.matmul %16, %17, %cst_18 {dimension_numbers = #tpu.dot_dimension_numbers<[1], [0], [0], [1], [0, 0, 1, 1], [], []>} : vector<128x128xbf16>, vector<128x128xbf16>, vector<128x128xf32> -> vector<128x128xf32>
      %19 = arith.addf %15, %18 : vector<128x128xf32>
      %c0_19 = arith.constant 0 : index
      %c0_20 = arith.constant 0 : index
      %20 = vector.load %arg7[%c0_19, %c0_20] : memref<1x128xf32, #tpu.memory_space<vmem>>, vector<1x128xf32>
      %21 = vector.broadcast %20 : vector<1x128xf32> to vector<128x128xf32>
      %22 = arith.addf %19, %21 : vector<128x128xf32>
      %cst_21 = arith.constant 0.000000e+00 : f32
      %23 = vector.broadcast %cst_21 : f32 to vector<128x128xf32>
      %24 = arith.maximumf %22, %23 : vector<128x128xf32>
      %25 = arith.truncf %24 : vector<128x128xf32> to vector<128x128xbf16>
      %c0_22 = arith.constant 0 : index
      %c0_23 = arith.constant 0 : index
      %26 = vector.load %arg8[%c0_22, %c0_23] : memref<128x128xbf16, #tpu.memory_space<vmem>>, vector<128x128xbf16>
      tpu.vector_store %arg8[%c0_22, %c0_23], %25 {strides = array<i32>} : memref<128x128xbf16, #tpu.memory_space<vmem>>, vector<128x128xbf16>,
    } else {
    }
    return
  }
  func.func @transform_0(%arg0: i32, %arg1: i32) -> (i32, i32) {
    %c0_i32 = arith.constant 0 : i32
    return %arg0, %arg1 : i32, i32
  }
  func.func @transform_1(%arg0: i32, %arg1: i32) -> (i32, i32) {
    %c0_i32 = arith.constant 0 : i32
    %c0_i32_0 = arith.constant 0 : i32
    return %arg1, %c0_i32 : i32, i32
  }
  func.func @transform_2(%arg0: i32, %arg1: i32) -> (i32, i32) {
    %c0_i32 = arith.constant 0 : i32
    %c0_i32_0 = arith.constant 0 : i32
    return %arg0, %c0_i32 : i32, i32
  }
  func.func @transform_3(%arg0: i32, %arg1: i32) -> (i32, i32) {
    %c0_i32 = arith.constant 0 : i32
    %c0_i32_0 = arith.constant 0 : i32
    %c0_i32_1 = arith.constant 0 : i32
    return %c0_i32, %c0_i32_0 : i32, i32
  }
  func.func @transform_4(%arg0: i32, %arg1: i32) -> (i32, i32) {
    %c0_i32 = arith.constant 0 : i32
    %c0_i32_0 = arith.constant 0 : i32
    %c0_i32_1 = arith.constant 0 : i32
    return %c0_i32, %c0_i32_0 : i32, i32
  }
  func.func @transform_5(%arg0: i32, %arg1: i32) -> (i32, i32) {
    %c0_i32 = arith.constant 0 : i32
    %c0_i32_0 = arith.constant 0 : i32
    %c0_i32_1 = arith.constant 0 : i32
    return %c0_i32, %c0_i32_0 : i32, i32
  }
  func.func @transform_6(%arg0: i32, %arg1: i32) -> (i32, i32) {
    %c0_i32 = arith.constant 0 : i32
    %c0_i32_0 = arith.constant 0 : i32
    return %arg0, %c0_i32 : i32, i32
  }
}

</mosaic_0001>

<llo_original>
// kernel: tpu_custom_call.1
$region0: #{tpu_custom_call.1}
  #allocation0 [shape = 'u32[]', space=smem, size = 0x4, offset = 0x4, fixed_abs, tag = 'smem constant byte address 0x4 - core index']
  #allocation1 [shape = 'u32[144,128]{1,0:T(1,128)}', space=vmem, size = 0x12000, scoped, tag = 'internal scratch']
  #allocation2 [shape = 'f32[128,128]{1,0:T(8,128)}', space=vmem, size = 0x10000, scoped, tag = 'scratch operand']
  %s0 = inlined_call_operand.hbm [shape: bf16[256,256], index: 0, kind: input, shape index: {}]
  %s1 = inlined_call_operand.hbm [shape: bf16[256,128], index: 1, kind: input, shape index: {}]
  %s2 = inlined_call_operand.hbm [shape: bf16[256,128], index: 2, kind: input, shape index: {}]
  %s3 = inlined_call_operand.hbm [shape: bf16[128,128], index: 3, kind: input, shape index: {}]
  %s4 = inlined_call_operand.hbm [shape: bf16[128,128], index: 4, kind: input, shape index: {}]
  %s5 = inlined_call_operand.vmem [shape: f32[1,128], index: 5, kind: input, shape index: {}]
  %s6 = inlined_call_operand.hbm [shape: bf16[256,128], index: 6, kind: output, shape index: {}]
  %s7 = sld [smem:[#allocation0]]
  $region85: #{tpu_custom_call.1} parent=0
    _
  %s9 = ssub.s32 1, %s7
  %s10 = scalar_select 0, %s9, %s7
  $region1: #{tpu_custom_call.1} parent=0
    #allocation3 [shape = 'u8[65536]{0}', space=vmem, size = 0x10000, scoped, tag = 'input window, operand 0']
    #allocation4 [shape = 's32[2]{0}', space=sflag, size = 0x8, scoped, tag = 'scoped memory for tpu_custom_call.1']
    #allocation5 [shape = 's32[2]{0}', space=sflag, size = 0x8, scoped, tag = 'scoped memory for tpu_custom_call.1']
    #allocation6 [shape = 'u8[65536]{0}', space=vmem, size = 0x10000, scoped, tag = 'input window, operand 1']
    #allocation7 [shape = 's32[2]{0}', space=sflag, size = 0x8, scoped, tag = 'scoped memory for tpu_custom_call.1']
    #allocation8 [shape = 'u8[65536]{0}', space=vmem, size = 0x10000, scoped, tag = 'input window, operand 2']
    #allocation9 [shape = 'u8[32768]{0}', space=vmem, size = 0x8000, scoped, tag = 'input window, operand 3, single buffered']
    #allocation10 [shape = 's32[1]{0}', space=sflag, size = 0x4, scoped, tag = 'scoped memory for tpu_custom_call.1']
    #allocation11 [shape = 'u8[32768]{0}', space=vmem, size = 0x8000, scoped, tag = 'input window, operand 4, single buffered']
    #allocation12 [shape = 'u8[65536]{0}', space=vmem, size = 0x10000, scoped, tag = 'output window, operand 0']
    %11 = vsyncpa [#allocation4], 0
    %s12 = scalar_lea.sflag [#allocation4], 1
    %13 = vsyncpa %s12, 0
    %14 = vsyncpa [#allocation7], 0
    %s15 = scalar_lea.sflag [#allocation7], 1
    %16 = vsyncpa %s15, 0
    %17 = vsyncpa [#allocation10], 0
    %18 = vsyncpa [#allocation5], 0
    %s19 = scalar_lea.sflag [#allocation5], 1
    %20 = vsyncpa %s19, 0
    loop: start=0, step=1, limit=6
    $region2: #{tpu_custom_call.1} parent=1 // loop_pre_header
      _
    $region3: #{tpu_custom_call.1} parent=1 // loop_header
      %s22 = sphi 0, %s26
      %p23 = scmp.ge.s32.totalorder %s22, 6
      %s29 = sphi 0, %s41
      %s30 = sphi 0, %s37
      %s31 = sphi 0, %s29
      %s32 = sphi 0, %s30
      %s33 = sphi 0, %s31
      %s34 = sphi 0, %s32
      %s46 = sphi 0, %s48
      %s49 = sphi 0, %s46
      %s50 = sphi 0, %s49
      %s66 = sphi 0, %s50
      %s72 = sphi 0, %s74
      %s75 = sphi 0, %s72
      %s76 = sphi 0, %s75
      %s92 = sphi 0, %s76
      %s98 = sphi 0, %s100
      %s101 = sphi 0, %s98
      %s102 = sphi 0, %s101
      %s118 = sphi 0, %s102
      %s122 = sphi 0, %s122
      %s124 = sphi 0, %s122
      %s125 = sphi 0, %s124
      %s139 = sphi 0, %s125
      %s143 = sphi 0, %s143
      %s145 = sphi 0, %s143
      %s146 = sphi 0, %s145
      %s160 = sphi 0, %s146
      %s164 = sphi 0, %s164
      %s166 = sphi 0, %s164
      %s167 = sphi 0, %s166
      %s181 = sphi 0, %s167
      %s187 = sphi 0, %s189
      %s190 = sphi 0, %s187
      %s191 = sphi 0, %s190
      %s207 = sphi 0, %s191
    $region4: #{tpu_custom_call.1} parent=1 // loop_header_branch
      %25 = sbr.rel (%p23) target = $region8
    $region5: #{tpu_custom_call.1} parent=1 // loop_body
      %s27 = ssub.s32 %s22, 1
      %s28 = ssub.s32 %s22, 2
      %s35 = sadd.s32 1, %s30
      %p36 = scmp.ge.s32.totalorder %s35, 2
      %s37 = scalar_select %p36, 0, %s35
      %s38 = sadd.s32 1, %s29
      %s39 = scalar_select %p36, %s38, %s29
      %p40 = scmp.ge.s32.totalorder %s39, 2
      %s41 = scalar_select %p40, 0, %s39
      %s42 = ssub.s32 %s29, %s41
      %s43 = ssub.s32 %s30, %s37
      %s44 = sor.u32 %s42, %s43
      %p45 = scmp.eq.s32.totalorder %s44, 0
      %s47 = sadd.s32 %s46, 1
      %s48 = scalar_select %p45, %s46, %s47
      %p51 = pneg %p45
      %p52 = scmp.eq.s32.totalorder %s22, 3
      %p53 = por %p51, %p52
      %p54 = scmp.ne.s32.totalorder %s46, %s49
      %p55 = scmp.eq.s32.totalorder %s22, 0
      %p56 = por %p54, %p55
      %p57 = scmp.ne.s32.totalorder %s46, %s49
      %p58 = scmp.eq.s32.totalorder %s27, 3
      %p59 = por %p57, %p58
      %p60 = scmp.ne.s32.totalorder %s49, %s50
      %p61 = scmp.eq.s32.totalorder %s27, 0
      %p62 = por %p60, %p61
      %p63 = scmp.ne.s32.totalorder %s49, %s50
      %p64 = scmp.eq.s32.totalorder %s28, 3
      %p65 = por %p63, %p64
      %p67 = scmp.ne.s32.totalorder %s50, %s66
      %p68 = scmp.eq.s32.totalorder %s28, 0
      %p69 = por %p67, %p68
      %s70 = ssub.s32 %s30, %s37
      %p71 = scmp.eq.s32.totalorder %s70, 0
      %s73 = sadd.s32 %s72, 1
      %s74 = scalar_select %p71, %s72, %s73
      %p77 = pneg %p71
      %p78 = scmp.eq.s32.totalorder %s22, 3
      %p79 = por %p77, %p78
      %p80 = scmp.ne.s32.totalorder %s72, %s75
      %p81 = scmp.eq.s32.totalorder %s22, 0
      %p82 = por %p80, %p81
      %p83 = scmp.ne.s32.totalorder %s72, %s75
      %p84 = scmp.eq.s32.totalorder %s27, 3
      %p85 = por %p83, %p84
      %p86 = scmp.ne.s32.totalorder %s75, %s76
      %p87 = scmp.eq.s32.totalorder %s27, 0
      %p88 = por %p86, %p87
      %p89 = scmp.ne.s32.totalorder %s75, %s76
      %p90 = scmp.eq.s32.totalorder %s28, 3
      %p91 = por %p89, %p90
      %p93 = scmp.ne.s32.totalorder %s76, %s92
      %p94 = scmp.eq.s32.totalorder %s28, 0
      %p95 = por %p93, %p94
      %s96 = ssub.s32 %s29, %s41
      %p97 = scmp.eq.s32.totalorder %s96, 0
      %s99 = sadd.s32 %s98, 1
      %s100 = scalar_select %p97, %s98, %s99
      %p103 = pneg %p97
      %p104 = scmp.eq.s32.totalorder %s22, 3
      %p105 = por %p103, %p104
      %p106 = scmp.ne.s32.totalorder %s98, %s101
      %p107 = scmp.eq.s32.totalorder %s22, 0
      %p108 = por %p106, %p107
      %p109 = scmp.ne.s32.totalorder %s98, %s101
      %p110 = scmp.eq.s32.totalorder %s27, 3
      %p111 = por %p109, %p110
      %p112 = scmp.ne.s32.totalorder %s101, %s102
      %p113 = scmp.eq.s32.totalorder %s27, 0
      %p114 = por %p112, %p113
      %p115 = scmp.ne.s32.totalorder %s101, %s102
      %p116 = scmp.eq.s32.totalorder %s28, 3
      %p117 = por %p115, %p116
      %p119 = scmp.ne.s32.totalorder %s102, %s118
      %p120 = scmp.eq.s32.totalorder %s28, 0
      %p121 = por %p119, %p120
      %s123 = sadd.s32 %s122, 1
      %p126 = scmp.eq.s32.totalorder %s22, 3
      %p127 = scmp.ne.s32.totalorder %s122, %s124
      %p128 = scmp.eq.s32.totalorder %s22, 0
      %p129 = por %p127, %p128
      %p130 = scmp.ne.s32.totalorder %s122, %s124
      %p131 = scmp.eq.s32.totalorder %s27, 3
      %p132 = por %p130, %p131
      %p133 = scmp.ne.s32.totalorder %s124, %s125
      %p134 = scmp.eq.s32.totalorder %s27, 0
      %p135 = por %p133, %p134
      %p136 = scmp.ne.s32.totalorder %s124, %s125
      %p137 = scmp.eq.s32.totalorder %s28, 3
      %p138 = por %p136, %p137
      %p140 = scmp.ne.s32.totalorder %s125, %s139
      %p141 = scmp.eq.s32.totalorder %s28, 0
      %p142 = por %p140, %p141
      %s144 = sadd.s32 %s143, 1
      %p147 = scmp.eq.s32.totalorder %s22, 3
      %p148 = scmp.ne.s32.totalorder %s143, %s145
      %p149 = scmp.eq.s32.totalorder %s22, 0
      %p150 = por %p148, %p149
      %p151 = scmp.ne.s32.totalorder %s143, %s145
      %p152 = scmp.eq.s32.totalorder %s27, 3
      %p153 = por %p151, %p152
      %p154 = scmp.ne.s32.totalorder %s145, %s146
      %p155 = scmp.eq.s32.totalorder %s27, 0
      %p156 = por %p154, %p155
      %p157 = scmp.ne.s32.totalorder %s145, %s146
      %p158 = scmp.eq.s32.totalorder %s28, 3
      %p159 = por %p157, %p158
      %p161 = scmp.ne.s32.totalorder %s146, %s160
      %p162 = scmp.eq.s32.totalorder %s28, 0
      %p163 = por %p161, %p162
      %s165 = sadd.s32 %s164, 1
      %p168 = scmp.eq.s32.totalorder %s22, 3
      %p169 = scmp.ne.s32.totalorder %s164, %s166
      %p170 = scmp.eq.s32.totalorder %s22, 0
      %p171 = por %p169, %p170
      %p172 = scmp.ne.s32.totalorder %s164, %s166
      %p173 = scmp.eq.s32.totalorder %s27, 3
      %p174 = por %p172, %p173
      %p175 = scmp.ne.s32.totalorder %s166, %s167
      %p176 = scmp.eq.s32.totalorder %s27, 0
      %p177 = por %p175, %p176
      %p178 = scmp.ne.s32.totalorder %s166, %s167
      %p179 = scmp.eq.s32.totalorder %s28, 3
      %p180 = por %p178, %p179
      %p182 = scmp.ne.s32.totalorder %s167, %s181
      %p183 = scmp.eq.s32.totalorder %s28, 0
      %p184 = por %p182, %p183
      %s185 = ssub.s32 %s29, %s41
      %p186 = scmp.eq.s32.totalorder %s185, 0
      %s188 = sadd.s32 %s187, 1
      %s189 = scalar_select %p186, %s187, %s188
      %p192 = pneg %p186
      %p193 = scmp.eq.s32.totalorder %s22, 3
      %p194 = por %p192, %p193
      %p195 = scmp.ne.s32.totalorder %s187, %s190
      %p196 = scmp.eq.s32.totalorder %s22, 0
      %p197 = por %p195, %p196
      %p198 = scmp.ne.s32.totalorder %s187, %s190
      %p199 = scmp.eq.s32.totalorder %s27, 3
      %p200 = por %p198, %p199
      %p201 = scmp.ne.s32.totalorder %s190, %s191
      %p202 = scmp.eq.s32.totalorder %s27, 0
      %p203 = por %p201, %p202
      %p204 = scmp.ne.s32.totalorder %s190, %s191
      %p205 = scmp.eq.s32.totalorder %s28, 3
      %p206 = por %p204, %p205
      %p208 = scmp.ne.s32.totalorder %s191, %s207
      %p209 = scmp.eq.s32.totalorder %s28, 0
      %p210 = por %p208, %p209
      %p211 = scmp.le.s32.totalorder 1, %s22
      %p212 = scmp.lt.s32.totalorder %s22, 5
      %p213 = pnand %p211, %p212
      %p214 = pneg %p213
      // Predicated region
      $region9: #{tpu_custom_call.1} parent=5 // pred_check
        _
      $region10: #{tpu_custom_call.1} parent=5 // pred_check_branch
        %216 = sbr.rel (%p213) target = $region12
      $region11: #{tpu_custom_call.1} parent=5 // pred_region
        %s217 = ssub.s32 %s22, 1
        // Predicated region
        $region13: #{tpu_custom_call.1} parent=11 // pred_check
          %p218 = pneg %p135
        $region14: #{tpu_custom_call.1} parent=11 // pred_check_branch
          %220 = sbr.rel (%p218) target = $region16
        $region15: #{tpu_custom_call.1} parent=11 // pred_region
          %s222 = ssub.s32 1024, 1024
          %223 = vsyncadd [#allocation10], %s222
          %s224 = sshll.u32 [#allocation9], 4
          %s225 = int_to_ptr.vmem [resolvable:$true] %s224
          %230 = dma.hbm_to_vmem [thread:$0]  %s3, 1024, %s225, [#allocation10], 64, 64, 4
        $region16: #{tpu_custom_call.1} parent=11 // pred_fallthru
          _
        // Predicated region
        $region17: #{tpu_custom_call.1} parent=11 // pred_check
          %p231 = pneg %p156
        $region18: #{tpu_custom_call.1} parent=11 // pred_check_branch
          %233 = sbr.rel (%p231) target = $region20
        $region19: #{tpu_custom_call.1} parent=11 // pred_region
          %s235 = ssub.s32 1024, 1024
          %236 = vsyncadd [#allocation10], %s235
          %s237 = sshll.u32 [#allocation11], 4
          %s238 = int_to_ptr.vmem [resolvable:$true] %s237
          %243 = dma.hbm_to_vmem [thread:$0]  %s4, 1024, %s238, [#allocation10], 64, 64, 4
        $region20: #{tpu_custom_call.1} parent=11 // pred_fallthru
          _
        // Predicated region
        $region21: #{tpu_custom_call.1} parent=11 // pred_check
          %p244 = pneg %p177
        $region22: #{tpu_custom_call.1} parent=11 // pred_check_branch
          %246 = sbr.rel (%p244) target = $region24
        $region23: #{tpu_custom_call.1} parent=11 // pred_region
          _
        $region24: #{tpu_custom_call.1} parent=11 // pred_fallthru
          _
      $region12: #{tpu_custom_call.1} parent=5 // pred_fallthru
        _
      %p247 = scmp.lt.s32.totalorder %s22, 4
      // Predicated region
      $region25: #{tpu_custom_call.1} parent=5 // pred_check
        %p248 = pneg %p247
      $region26: #{tpu_custom_call.1} parent=5 // pred_check_branch
        %250 = sbr.rel (%p248) target = $region28
      $region27: #{tpu_custom_call.1} parent=5 // pred_region
        // Predicated region
        $region29: #{tpu_custom_call.1} parent=27 // pred_check
          %p251 = pneg %p56
        $region30: #{tpu_custom_call.1} parent=27 // pred_check_branch
          %253 = sbr.rel (%p251) target = $region32
        $region31: #{tpu_custom_call.1} parent=27 // pred_region
          %s254 = sand.u32 %s46, 1
          %s255 = scalar_lea.sflag [#allocation4], %s254
          %s256 = sand.u32 %s46, 1
          %s257 = smul.addr %s256, 64
          %s258 = scalar_lea.vmem [#allocation3], %s257
          %s259 = smul.u32 16, %s29
          %s261 = ssub.s32 1024, 1024
          %262 = vsyncadd %s255, %s261
          %s263 = smul.addr %s259, 2
          %s264 = sadd.s32 %s30, %s263
          %s265 = smul.addr %s264, 64
          %s266 = scalar_lea.hbm %s0, %s265
          %s267 = sshll.u32 %s258, 4
          %s268 = int_to_ptr.vmem [resolvable:$true] %s267
          %273 = dma.hbm_to_vmem [thread:$0]  %s266, 1024, %s268, %s255, 128, 64, 4
        $region32: #{tpu_custom_call.1} parent=27 // pred_fallthru
          _
        // Predicated region
        $region33: #{tpu_custom_call.1} parent=27 // pred_check
          %p274 = pneg %p82
        $region34: #{tpu_custom_call.1} parent=27 // pred_check_branch
          %276 = sbr.rel (%p274) target = $region36
        $region35: #{tpu_custom_call.1} parent=27 // pred_region
          %s277 = sand.u32 %s22, 1
          %s278 = scalar_lea.sflag [#allocation7], %s277
          %s279 = sand.u32 %s72, 1
          %s280 = smul.addr %s279, 64
          %s281 = scalar_lea.vmem [#allocation6], %s280
          %s282 = smul.u32 16, %s30
          %s284 = ssub.s32 1024, 1024
          %285 = vsyncadd %s278, %s284
          %s286 = smul.addr %s282, 64
          %s287 = scalar_lea.hbm %s1, %s286
          %s288 = sshll.u32 %s281, 4
          %s289 = int_to_ptr.vmem [resolvable:$true] %s288
          %294 = dma.hbm_to_vmem [thread:$0]  %s287, 1024, %s289, %s278, 64, 64, 4
        $region36: #{tpu_custom_call.1} parent=27 // pred_fallthru
          _
        // Predicated region
        $region37: #{tpu_custom_call.1} parent=27 // pred_check
          %p295 = pneg %p108
        $region38: #{tpu_custom_call.1} parent=27 // pred_check_branch
          %297 = sbr.rel (%p295) target = $region40
        $region39: #{tpu_custom_call.1} parent=27 // pred_region
          %s298 = sand.u32 %s22, 1
          %s299 = scalar_lea.sflag [#allocation7], %s298
          %s300 = sand.u32 %s98, 1
          %s301 = smul.addr %s300, 64
          %s302 = scalar_lea.vmem [#allocation8], %s301
          %s303 = smul.u32 16, %s29
          %s305 = ssub.s32 1024, 1024
          %306 = vsyncadd %s299, %s305
          %s307 = smul.addr %s303, 64
          %s308 = scalar_lea.hbm %s2, %s307
          %s309 = sshll.u32 %s302, 4
          %s310 = int_to_ptr.vmem [resolvable:$true] %s309
          %315 = dma.hbm_to_vmem [thread:$0]  %s308, 1024, %s310, %s299, 64, 64, 4
        $region40: #{tpu_custom_call.1} parent=27 // pred_fallthru
          _
      $region28: #{tpu_custom_call.1} parent=5 // pred_fallthru
        _
      %p316 = scmp.le.s32.totalorder 1, %s22
      %p317 = scmp.lt.s32.totalorder %s22, 5
      %p318 = pnand %p316, %p317
      %p319 = pneg %p318
      // Predicated region
      $region41: #{tpu_custom_call.1} parent=5 // pred_check
        _
      $region42: #{tpu_custom_call.1} parent=5 // pred_check_branch
        %321 = sbr.rel (%p318) target = $region44
      $region43: #{tpu_custom_call.1} parent=5 // pred_region
        %s322 = ssub.s32 %s22, 1
        %s323 = sand.u32 %s49, 1
        %s324 = scalar_lea.sflag [#allocation4], %s323
        %s325 = sand.u32 %s49, 1
        %s326 = smul.addr %s325, 64
        %s327 = scalar_lea.vmem [#allocation3], %s326
        // Predicated region
        $region45: #{tpu_custom_call.1} parent=43 // pred_check
          %p328 = pneg %p62
        $region46: #{tpu_custom_call.1} parent=43 // pred_check_branch
          %330 = sbr.rel (%p328) target = $region48
        $region47: #{tpu_custom_call.1} parent=43 // pred_region
          %331 = dma.done %s324, 1024
        $region48: #{tpu_custom_call.1} parent=43 // pred_fallthru
          _
        %s332 = sand.u32 %s27, 1
        %s333 = scalar_lea.sflag [#allocation7], %s332
        %s334 = sand.u32 %s75, 1
        %s335 = smul.addr %s334, 64
        %s336 = scalar_lea.vmem [#allocation6], %s335
        // Predicated region
        $region49: #{tpu_custom_call.1} parent=43 // pred_check
          %p337 = pneg %p88
        $region50: #{tpu_custom_call.1} parent=43 // pred_check_branch
          %339 = sbr.rel (%p337) target = $region52
        $region51: #{tpu_custom_call.1} parent=43 // pred_region
          %340 = dma.done %s333, 1024
        $region52: #{tpu_custom_call.1} parent=43 // pred_fallthru
          _
        %s341 = sand.u32 %s27, 1
        %s342 = scalar_lea.sflag [#allocation7], %s341
        %s343 = sand.u32 %s101, 1
        %s344 = smul.addr %s343, 64
        %s345 = scalar_lea.vmem [#allocation8], %s344
        // Predicated region
        $region53: #{tpu_custom_call.1} parent=43 // pred_check
          %p346 = pneg %p114
        $region54: #{tpu_custom_call.1} parent=43 // pred_check_branch
          %348 = sbr.rel (%p346) target = $region56
        $region55: #{tpu_custom_call.1} parent=43 // pred_region
          %349 = dma.done %s342, 1024
        $region56: #{tpu_custom_call.1} parent=43 // pred_fallthru
          _
        // Predicated region
        $region57: #{tpu_custom_call.1} parent=43 // pred_check
          %p350 = pneg %p135
        $region58: #{tpu_custom_call.1} parent=43 // pred_check_branch
          %352 = sbr.rel (%p350) target = $region60
        $region59: #{tpu_custom_call.1} parent=43 // pred_region
          %353 = dma.done [#allocation10], 1024
        $region60: #{tpu_custom_call.1} parent=43 // pred_fallthru
          _
        // Predicated region
        $region61: #{tpu_custom_call.1} parent=43 // pred_check
          %p354 = pneg %p156
        $region62: #{tpu_custom_call.1} parent=43 // pred_check_branch
          %356 = sbr.rel (%p354) target = $region64
        $region63: #{tpu_custom_call.1} parent=43 // pred_region
          %357 = dma.done [#allocation10], 1024
        $region64: #{tpu_custom_call.1} parent=43 // pred_fallthru
          _
        %s358 = sand.u32 %s49, 1
        %s359 = scalar_lea.sflag [#allocation4], %s358
        %s360 = sand.u32 %s49, 1
        %s361 = smul.addr %s360, 64
        %s362 = scalar_lea.vmem [#allocation3], %s361
        %p363 = pneg %p62
        %p364 = pneg %p59
        %s365 = sand.u32 %s27, 1
        %s366 = scalar_lea.sflag [#allocation7], %s365
        %s367 = sand.u32 %s75, 1
        %s368 = smul.addr %s367, 64
        %s369 = scalar_lea.vmem [#allocation6], %s368
        %p370 = pneg %p88
        %p371 = pneg %p85
        %s372 = sand.u32 %s27, 1
        %s373 = scalar_lea.sflag [#allocation7], %s372
        %s374 = sand.u32 %s101, 1
        %s375 = smul.addr %s374, 64
        %s376 = scalar_lea.vmem [#allocation8], %s375
        %p377 = pneg %p114
        %p378 = pneg %p111
        %p379 = pneg %p135
        %p380 = pneg %p132
        %p381 = pneg %p156
        %p382 = pneg %p153
        %p383 = pneg %p177
        %p384 = pneg %p174
        %p385 = pneg %p203
        %p386 = pneg %p200
        %s387 = sand.u32 %s190, 1
        %s388 = scalar_lea.sflag [#allocation5], %s387
        %s389 = sand.u32 %s190, 1
        %s390 = smul.addr %s389, 64
        %s391 = scalar_lea.vmem [#allocation12], %s390
        %s392 = smul.u32 16, %s31
        %s393 = smul.u32 16, %s32
        %s394 = smul.u32 16, %s31
        %s395 = smul.u32 16, %s31
        %p397 = scmp.eq.s32.totalorder %s32, 0
        // Predicated region
        $region65: #{tpu_custom_call.1} parent=43 // pred_check
          %p398 = pneg %p397
        $region66: #{tpu_custom_call.1} parent=43 // pred_check_branch
          %400 = sbr.rel (%p398) target = $region68
        $region67: #{tpu_custom_call.1} parent=43 // pred_region
          %401 = vst [vmem:[#allocation2] sm:$0xff] 0.0
          %402 = vst [vmem:[#allocation2 + $0x8] sm:$0xff] 0.0
          %403 = vst [vmem:[#allocation2 + $0x10] sm:$0xff] 0.0
          %404 = vst [vmem:[#allocation2 + $0x18] sm:$0xff] 0.0
          %405 = vst [vmem:[#allocation2 + $0x20] sm:$0xff] 0.0
          %406 = vst [vmem:[#allocation2 + $0x28] sm:$0xff] 0.0
          %407 = vst [vmem:[#allocation2 + $0x30] sm:$0xff] 0.0
          %408 = vst [vmem:[#allocation2 + $0x38] sm:$0xff] 0.0
          %409 = vst [vmem:[#allocation2 + $0x40] sm:$0xff] 0.0
          %410 = vst [vmem:[#allocation2 + $0x48] sm:$0xff] 0.0
          %411 = vst [vmem:[#allocation2 + $0x50] sm:$0xff] 0.0
          %412 = vst [vmem:[#allocation2 + $0x58] sm:$0xff] 0.0
          %413 = vst [vmem:[#allocation2 + $0x60] sm:$0xff] 0.0
          %414 = vst [vmem:[#allocation2 + $0x68] sm:$0xff] 0.0
          %415 = vst [vmem:[#allocation2 + $0x70] sm:$0xff] 0.0
          %416 = vst [vmem:[#allocation2 + $0x78] sm:$0xff] 0.0
        $region68: #{tpu_custom_call.1} parent=43 // pred_fallthru
          _
        %v417 = vld [vmem:[#allocation2] sm:$0xff]
        %v418 = vld [vmem:[#allocation2 + $0x8] sm:$0xff]
        %v419 = vld [vmem:[#allocation2 + $0x10] sm:$0xff]
        %v420 = vld [vmem:[#allocation2 + $0x18] sm:$0xff]
        %v421 = vld [vmem:[#allocation2 + $0x20] sm:$0xff]
        %v422 = vld [vmem:[#allocation2 + $0x28] sm:$0xff]
        %v423 = vld [vmem:[#allocation2 + $0x30] sm:$0xff]
        %v424 = vld [vmem:[#allocation2 + $0x38] sm:$0xff]
        %v425 = vld [vmem:[#allocation2 + $0x40] sm:$0xff]
        %v426 = vld [vmem:[#allocation2 + $0x48] sm:$0xff]
        %v427 = vld [vmem:[#allocation2 + $0x50] sm:$0xff]
        %v428 = vld [vmem:[#allocation2 + $0x58] sm:$0xff]
        %v429 = vld [vmem:[#allocation2 + $0x60] sm:$0xff]
        %v430 = vld [vmem:[#allocation2 + $0x68] sm:$0xff]
        %v431 = vld [vmem:[#allocation2 + $0x70] sm:$0xff]
        %v432 = vld [vmem:[#allocation2 + $0x78] sm:$0xff]
        %v433 = vld [vmem:[%s327] sm:$0xf]
        %v434 = vld [vmem:[%s327 + $0x4] sm:$0xf]
        %v435 = vld [vmem:[%s327 + $0x8] sm:$0xf]
        %v436 = vld [vmem:[%s327 + $0xc] sm:$0xf]
        %v437 = vld [vmem:[%s327 + $0x10] sm:$0xf]
        %v438 = vld [vmem:[%s327 + $0x14] sm:$0xf]
        %v439 = vld [vmem:[%s327 + $0x18] sm:$0xf]
        %v440 = vld [vmem:[%s327 + $0x1c] sm:$0xf]
        %v441 = vld [vmem:[%s327 + $0x20] sm:$0xf]
        %v442 = vld [vmem:[%s327 + $0x24] sm:$0xf]
        %v443 = vld [vmem:[%s327 + $0x28] sm:$0xf]
        %v444 = vld [vmem:[%s327 + $0x2c] sm:$0xf]
        %v445 = vld [vmem:[%s327 + $0x30] sm:$0xf]
        %v446 = vld [vmem:[%s327 + $0x34] sm:$0xf]
        %v447 = vld [vmem:[%s327 + $0x38] sm:$0xf]
        %v448 = vld [vmem:[%s327 + $0x3c] sm:$0xf]
        %v449 = vld [vmem:[%s336] sm:$0xf]
        %v450 = vld [vmem:[%s336 + $0x4] sm:$0xf]
        %v451 = vld [vmem:[%s336 + $0x8] sm:$0xf]
        %v452 = vld [vmem:[%s336 + $0xc] sm:$0xf]
        %v453 = vld [vmem:[%s336 + $0x10] sm:$0xf]
        %v454 = vld [vmem:[%s336 + $0x14] sm:$0xf]
        %v455 = vld [vmem:[%s336 + $0x18] sm:$0xf]
        %v456 = vld [vmem:[%s336 + $0x1c] sm:$0xf]
        %v457 = vld [vmem:[%s336 + $0x20] sm:$0xf]
        %v458 = vld [vmem:[%s336 + $0x24] sm:$0xf]
        %v459 = vld [vmem:[%s336 + $0x28] sm:$0xf]
        %v460 = vld [vmem:[%s336 + $0x2c] sm:$0xf]
        %v461 = vld [vmem:[%s336 + $0x30] sm:$0xf]
        %v462 = vld [vmem:[%s336 + $0x34] sm:$0xf]
        %v463 = vld [vmem:[%s336 + $0x38] sm:$0xf]
        %v464 = vld [vmem:[%s336 + $0x3c] sm:$0xf]
        %v481 = vunpack.c.l.b16 %v433
        %v482 = vunpack.c.l.b16 %v434
        %v483 = vunpack.c.l.b16 %v435
        %v484 = vunpack.c.l.b16 %v436
        %v485 = vunpack.c.l.b16 %v437
        %v486 = vunpack.c.l.b16 %v438
        %v487 = vunpack.c.l.b16 %v439
        %v488 = vunpack.c.l.b16 %v440
        %v489 = vunpack.c.l.b16 %v441
        %v490 = vunpack.c.l.b16 %v442
        %v491 = vunpack.c.l.b16 %v443
        %v492 = vunpack.c.l.b16 %v444
        %v493 = vunpack.c.l.b16 %v445
        %v494 = vunpack.c.l.b16 %v446
        %v495 = vunpack.c.l.b16 %v447
        %v496 = vunpack.c.l.b16 %v448
        %v497 = vpack.c.b16 %v482, %v481
        %v498 = vpack.c.b16 %v484, %v483
        %v499 = vpack.c.b16 %v486, %v485
        %v500 = vpack.c.b16 %v488, %v487
        %v501 = vpack.c.b16 %v490, %v489
        %v502 = vpack.c.b16 %v492, %v491
        %v503 = vpack.c.b16 %v494, %v493
        %v504 = vpack.c.b16 %v496, %v495
        %v529 = vunpack.c.l.b16 %v449
        %v530 = vunpack.c.l.b16 %v450
        %v531 = vunpack.c.l.b16 %v451
        %v532 = vunpack.c.l.b16 %v452
        %v533 = vunpack.c.l.b16 %v453
        %v534 = vunpack.c.l.b16 %v454
        %v535 = vunpack.c.l.b16 %v455
        %v536 = vunpack.c.l.b16 %v456
        %v537 = vunpack.c.l.b16 %v457
        %v538 = vunpack.c.l.b16 %v458
        %v539 = vunpack.c.l.b16 %v459
        %v540 = vunpack.c.l.b16 %v460
        %v541 = vunpack.c.l.b16 %v461
        %v542 = vunpack.c.l.b16 %v462
        %v543 = vunpack.c.l.b16 %v463
        %v544 = vunpack.c.l.b16 %v464
        %v545 = vpack.c.b16 %v530, %v529
        %v546 = vpack.c.b16 %v532, %v531
        %v547 = vpack.c.b16 %v534, %v533
        %v548 = vpack.c.b16 %v536, %v535
        %v549 = vpack.c.b16 %v538, %v537
        %v550 = vpack.c.b16 %v540, %v539
        %v551 = vpack.c.b16 %v542, %v541
        %v552 = vpack.c.b16 %v544, %v543
        %561 = vmatprep.subr.bf16.mxu0 0
        %562 = vmatpush1.bf16.msra.mxu0 %v545
        %563 = vmatprep.subr.bf16.mxu0 0
        %564 = vmatpush1.bf16.msra.mxu0 %v546
        %565 = vmatprep.subr.bf16.mxu0 0
        %566 = vmatpush1.bf16.msra.mxu0 %v547
        %567 = vmatprep.subr.bf16.mxu0 0
        %568 = vmatpush1.bf16.msra.mxu0 %v548
        %569 = vmatprep.subr.bf16.mxu0 0
        %570 = vmatpush1.bf16.msra.mxu0 %v549
        %571 = vmatprep.subr.bf16.mxu0 0
        %572 = vmatpush1.bf16.msra.mxu0 %v550
        %573 = vmatprep.subr.bf16.mxu0 0
        %574 = vmatpush1.bf16.msra.mxu0 %v551
        %575 = vmatprep.subr.bf16.mxu0 0
        %576 = vmatpush1.bf16.msra.mxu0 %v552
        %577 = vmatprep.subr.bf16.mxu0 0
        %578 = vmatpush1.bf16.msra.mxu0 0
        %579 = vmatprep.subr.bf16.mxu0 0
        %580 = vmatpush1.bf16.msra.mxu0 0
        %581 = vmatprep.subr.bf16.mxu0 0
        %582 = vmatpush1.bf16.msra.mxu0 0
        %583 = vmatprep.subr.bf16.mxu0 0
        %584 = vmatpush1.bf16.msra.mxu0 0
        %585 = vmatprep.subr.bf16.mxu0 0
        %586 = vmatpush1.bf16.msra.mxu0 0
        %587 = vmatprep.subr.bf16.mxu0 0
        %588 = vmatpush1.bf16.msra.mxu0 0
        %589 = vmatprep.subr.bf16.mxu0 0
        %590 = vmatpush1.bf16.msra.mxu0 0
        %591 = vmatprep.subr.bf16.mxu0 0
        %592 = vmatpush1.bf16.msra.mxu0 0
        %593 = vmatprep.mubr.bf16.mxu0 0
        %594 = vmatmul.mubr.bf16.gmra.mrb[0].mxu0 %v497
        %v595 = vpop.f32.mrb[0].mxu0
        %v596 = vadd.f32 0.0, %v595
        %v597 = vpop.f32.mrb[0].mxu0
        %v598 = vpop.f32.mrb[0].mxu0
        %v599 = vadd.f32 0.0, %v598
        %v600 = vpop.f32.mrb[0].mxu0
        %601 = vmatprep.mubr.bf16.mxu0 0
        %602 = vmatmul.mubr.bf16.gmra.mrb[0].mxu0 %v498
        %v603 = vpop.f32.mrb[0].mxu0
        %v604 = vadd.f32 0.0, %v603
        %v605 = vpop.f32.mrb[0].mxu0
        %v606 = vpop.f32.mrb[0].mxu0
        %v607 = vadd.f32 0.0, %v606
        %v608 = vpop.f32.mrb[0].mxu0
        %609 = vmatprep.mubr.bf16.mxu0 0
        %610 = vmatmul.mubr.bf16.gmra.mrb[0].mxu0 %v499
        %v611 = vpop.f32.mrb[0].mxu0
        %v612 = vadd.f32 0.0, %v611
        %v613 = vpop.f32.mrb[0].mxu0
        %v614 = vpop.f32.mrb[0].mxu0
        %v615 = vadd.f32 0.0, %v614
        %v616 = vpop.f32.mrb[0].mxu0
        %617 = vmatprep.mubr.bf16.mxu0 0
        %618 = vmatmul.mubr.bf16.gmra.mrb[0].mxu0 %v500
        %v619 = vpop.f32.mrb[0].mxu0
        %v620 = vadd.f32 0.0, %v619
        %v621 = vpop.f32.mrb[0].mxu0
        %v622 = vpop.f32.mrb[0].mxu0
        %v623 = vadd.f32 0.0, %v622
        %v624 = vpop.f32.mrb[0].mxu0
        %625 = vmatprep.mubr.bf16.mxu0 0
        %626 = vmatmul.mubr.bf16.gmra.mrb[0].mxu0 %v501
        %v627 = vpop.f32.mrb[0].mxu0
        %v628 = vadd.f32 0.0, %v627
        %v629 = vpop.f32.mrb[0].mxu0
        %v630 = vpop.f32.mrb[0].mxu0
        %v631 = vadd.f32 0.0, %v630
        %v632 = vpop.f32.mrb[0].mxu0
        %633 = vmatprep.mubr.bf16.mxu0 0
        %634 = vmatmul.mubr.bf16.gmra.mrb[0].mxu0 %v502
        %v635 = vpop.f32.mrb[0].mxu0
        %v636 = vadd.f32 0.0, %v635
        %v637 = vpop.f32.mrb[0].mxu0
        %v638 = vpop.f32.mrb[0].mxu0
        %v639 = vadd.f32 0.0, %v638
        %v640 = vpop.f32.mrb[0].mxu0
        %641 = vmatprep.mubr.bf16.mxu0 0
        %642 = vmatmul.mubr.bf16.gmra.mrb[0].mxu0 %v503
        %v643 = vpop.f32.mrb[0].mxu0
        %v644 = vadd.f32 0.0, %v643
        %v645 = vpop.f32.mrb[0].mxu0
        %v646 = vpop.f32.mrb[0].mxu0
        %v647 = vadd.f32 0.0, %v646
        %v648 = vpop.f32.mrb[0].mxu0
        %649 = vmatprep.mubr.bf16.mxu0 0
        %650 = vmatmul.mubr.bf16.gmra.mrb[0].mxu0 %v504
        %v651 = vpop.f32.mrb[0].mxu0
        %v652 = vadd.f32 0.0, %v651
        %v653 = vpop.f32.mrb[0].mxu0
        %v654 = vpop.f32.mrb[0].mxu0
        %v655 = vadd.f32 0.0, %v654
        %v656 = vpop.f32.mrb[0].mxu0
        %657 = vdwg.mxu0
        %v658 = vadd.f32 %v417, %v596
        %v659 = vadd.f32 %v418, %v599
        %v660 = vadd.f32 %v419, %v604
        %v661 = vadd.f32 %v420, %v607
        %v662 = vadd.f32 %v421, %v612
        %v663 = vadd.f32 %v422, %v615
        %v664 = vadd.f32 %v423, %v620
        %v665 = vadd.f32 %v424, %v623
        %v666 = vadd.f32 %v425, %v628
        %v667 = vadd.f32 %v426, %v631
        %v668 = vadd.f32 %v427, %v636
        %v669 = vadd.f32 %v428, %v639
        %v670 = vadd.f32 %v429, %v644
        %v671 = vadd.f32 %v430, %v647
        %v672 = vadd.f32 %v431, %v652
        %v673 = vadd.f32 %v432, %v655
        %674 = vst [vmem:[#allocation2] sm:$0xff] %v658
        %675 = vst [vmem:[#allocation2 + $0x8] sm:$0xff] %v659
        %676 = vst [vmem:[#allocation2 + $0x10] sm:$0xff] %v660
        %677 = vst [vmem:[#allocation2 + $0x18] sm:$0xff] %v661
        %678 = vst [vmem:[#allocation2 + $0x20] sm:$0xff] %v662
        %679 = vst [vmem:[#allocation2 + $0x28] sm:$0xff] %v663
        %680 = vst [vmem:[#allocation2 + $0x30] sm:$0xff] %v664
        %681 = vst [vmem:[#allocation2 + $0x38] sm:$0xff] %v665
        %682 = vst [vmem:[#allocation2 + $0x40] sm:$0xff] %v666
        %683 = vst [vmem:[#allocation2 + $0x48] sm:$0xff] %v667
        %684 = vst [vmem:[#allocation2 + $0x50] sm:$0xff] %v668
        %685 = vst [vmem:[#allocation2 + $0x58] sm:$0xff] %v669
        %686 = vst [vmem:[#allocation2 + $0x60] sm:$0xff] %v670
        %687 = vst [vmem:[#allocation2 + $0x68] sm:$0xff] %v671
        %688 = vst [vmem:[#allocation2 + $0x70] sm:$0xff] %v672
        %689 = vst [vmem:[#allocation2 + $0x78] sm:$0xff] %v673
        %p690 = scmp.eq.s32.totalorder %s32, 1
        // Predicated region
        $region69: #{tpu_custom_call.1} parent=43 // pred_check
          %p691 = pneg %p690
        $region70: #{tpu_custom_call.1} parent=43 // pred_check_branch
          %693 = sbr.rel (%p691) target = $region72
        $region71: #{tpu_custom_call.1} parent=43 // pred_region
          %v694 = vld [vmem:[#allocation2] sm:$0xff]
          %v695 = vld [vmem:[#allocation2 + $0x8] sm:$0xff]
          %v696 = vld [vmem:[#allocation2 + $0x10] sm:$0xff]
          %v697 = vld [vmem:[#allocation2 + $0x18] sm:$0xff]
          %v698 = vld [vmem:[#allocation2 + $0x20] sm:$0xff]
          %v699 = vld [vmem:[#allocation2 + $0x28] sm:$0xff]
          %v700 = vld [vmem:[#allocation2 + $0x30] sm:$0xff]
          %v701 = vld [vmem:[#allocation2 + $0x38] sm:$0xff]
          %v702 = vld [vmem:[#allocation2 + $0x40] sm:$0xff]
          %v703 = vld [vmem:[#allocation2 + $0x48] sm:$0xff]
          %v704 = vld [vmem:[#allocation2 + $0x50] sm:$0xff]
          %v705 = vld [vmem:[#allocation2 + $0x58] sm:$0xff]
          %v706 = vld [vmem:[#allocation2 + $0x60] sm:$0xff]
          %v707 = vld [vmem:[#allocation2 + $0x68] sm:$0xff]
          %v708 = vld [vmem:[#allocation2 + $0x70] sm:$0xff]
          %v709 = vld [vmem:[#allocation2 + $0x78] sm:$0xff]
          %v710 = vpack.c.bf16 %v695, %v694
          %v711 = vpack.c.bf16 %v697, %v696
          %v712 = vpack.c.bf16 %v699, %v698
          %v713 = vpack.c.bf16 %v701, %v700
          %v714 = vpack.c.bf16 %v703, %v702
          %v715 = vpack.c.bf16 %v705, %v704
          %v716 = vpack.c.bf16 %v707, %v706
          %v717 = vpack.c.bf16 %v709, %v708
          %v718 = vld [vmem:[#allocation9] sm:$0xf]
          %v719 = vld [vmem:[#allocation9 + $0x4] sm:$0xf]
          %v720 = vld [vmem:[#allocation9 + $0x8] sm:$0xf]
          %v721 = vld [vmem:[#allocation9 + $0xc] sm:$0xf]
          %v722 = vld [vmem:[#allocation9 + $0x10] sm:$0xf]
          %v723 = vld [vmem:[#allocation9 + $0x14] sm:$0xf]
          %v724 = vld [vmem:[#allocation9 + $0x18] sm:$0xf]
          %v725 = vld [vmem:[#allocation9 + $0x1c] sm:$0xf]
          %v726 = vld [vmem:[#allocation9 + $0x20] sm:$0xf]
          %v727 = vld [vmem:[#allocation9 + $0x24] sm:$0xf]
          %v728 = vld [vmem:[#allocation9 + $0x28] sm:$0xf]
          %v729 = vld [vmem:[#allocation9 + $0x2c] sm:$0xf]
          %v730 = vld [vmem:[#allocation9 + $0x30] sm:$0xf]
          %v731 = vld [vmem:[#allocation9 + $0x34] sm:$0xf]
          %v732 = vld [vmem:[#allocation9 + $0x38] sm:$0xf]
          %v733 = vld [vmem:[#allocation9 + $0x3c] sm:$0xf]
          %v734 = vld [vmem:[%s345] sm:$0xf]
          %v735 = vld [vmem:[%s345 + $0x4] sm:$0xf]
          %v736 = vld [vmem:[%s345 + $0x8] sm:$0xf]
          %v737 = vld [vmem:[%s345 + $0xc] sm:$0xf]
          %v738 = vld [vmem:[%s345 + $0x10] sm:$0xf]
          %v739 = vld [vmem:[%s345 + $0x14] sm:$0xf]
          %v740 = vld [vmem:[%s345 + $0x18] sm:$0xf]
          %v741 = vld [vmem:[%s345 + $0x1c] sm:$0xf]
          %v742 = vld [vmem:[%s345 + $0x20] sm:$0xf]
          %v743 = vld [vmem:[%s345 + $0x24] sm:$0xf]
          %v744 = vld [vmem:[%s345 + $0x28] sm:$0xf]
          %v745 = vld [vmem:[%s345 + $0x2c] sm:$0xf]
          %v746 = vld [vmem:[%s345 + $0x30] sm:$0xf]
          %v747 = vld [vmem:[%s345 + $0x34] sm:$0xf]
          %v748 = vld [vmem:[%s345 + $0x38] sm:$0xf]
          %v749 = vld [vmem:[%s345 + $0x3c] sm:$0xf]
          %v750 = vld [vmem:[#allocation11] sm:$0xf]
          %v751 = vld [vmem:[#allocation11 + $0x4] sm:$0xf]
          %v752 = vld [vmem:[#allocation11 + $0x8] sm:$0xf]
          %v753 = vld [vmem:[#allocation11 + $0xc] sm:$0xf]
          %v754 = vld [vmem:[#allocation11 + $0x10] sm:$0xf]
          %v755 = vld [vmem:[#allocation11 + $0x14] sm:$0xf]
          %v756 = vld [vmem:[#allocation11 + $0x18] sm:$0xf]
          %v757 = vld [vmem:[#allocation11 + $0x1c] sm:$0xf]
          %v758 = vld [vmem:[#allocation11 + $0x20] sm:$0xf]
          %v759 = vld [vmem:[#allocation11 + $0x24] sm:$0xf]
          %v760 = vld [vmem:[#allocation11 + $0x28] sm:$0xf]
          %v761 = vld [vmem:[#allocation11 + $0x2c] sm:$0xf]
          %v762 = vld [vmem:[#allocation11 + $0x30] sm:$0xf]
          %v763 = vld [vmem:[#allocation11 + $0x34] sm:$0xf]
          %v764 = vld [vmem:[#allocation11 + $0x38] sm:$0xf]
          %v765 = vld [vmem:[#allocation11 + $0x3c] sm:$0xf]
          %v782 = vunpack.c.l.b16 %v734
          %v783 = vunpack.c.l.b16 %v735
          %v784 = vunpack.c.l.b16 %v736
          %v785 = vunpack.c.l.b16 %v737
          %v786 = vunpack.c.l.b16 %v738
          %v787 = vunpack.c.l.b16 %v739
          %v788 = vunpack.c.l.b16 %v740
          %v789 = vunpack.c.l.b16 %v741
          %v790 = vunpack.c.l.b16 %v742
          %v791 = vunpack.c.l.b16 %v743
          %v792 = vunpack.c.l.b16 %v744
          %v793 = vunpack.c.l.b16 %v745
          %v794 = vunpack.c.l.b16 %v746
          %v795 = vunpack.c.l.b16 %v747
          %v796 = vunpack.c.l.b16 %v748
          %v797 = vunpack.c.l.b16 %v749
          %v798 = vpack.c.b16 %v783, %v782
          %v799 = vpack.c.b16 %v785, %v784
          %v800 = vpack.c.b16 %v787, %v786
          %v801 = vpack.c.b16 %v789, %v788
          %v802 = vpack.c.b16 %v791, %v790
          %v803 = vpack.c.b16 %v793, %v792
          %v804 = vpack.c.b16 %v795, %v794
          %v805 = vpack.c.b16 %v797, %v796
          %v830 = vunpack.c.l.b16 %v750
          %v831 = vunpack.c.l.b16 %v751
          %v832 = vunpack.c.l.b16 %v752
          %v833 = vunpack.c.l.b16 %v753
          %v834 = vunpack.c.l.b16 %v754
          %v835 = vunpack.c.l.b16 %v755
          %v836 = vunpack.c.l.b16 %v756
          %v837 = vunpack.c.l.b16 %v757
          %v838 = vunpack.c.l.b16 %v758
          %v839 = vunpack.c.l.b16 %v759
          %v840 = vunpack.c.l.b16 %v760
          %v841 = vunpack.c.l.b16 %v761
          %v842 = vunpack.c.l.b16 %v762
          %v843 = vunpack.c.l.b16 %v763
          %v844 = vunpack.c.l.b16 %v764
          %v845 = vunpack.c.l.b16 %v765
          %v846 = vpack.c.b16 %v831, %v830
          %v847 = vpack.c.b16 %v833, %v832
          %v848 = vpack.c.b16 %v835, %v834
          %v849 = vpack.c.b16 %v837, %v836
          %v850 = vpack.c.b16 %v839, %v838
          %v851 = vpack.c.b16 %v841, %v840
          %v852 = vpack.c.b16 %v843, %v842
          %v853 = vpack.c.b16 %v845, %v844
          %862 = vmatprep.subr.bf16.mxu0 0
          %863 = vmatpush1.bf16.msra.mxu0 %v846
          %864 = vmatprep.subr.bf16.mxu0 0
          %865 = vmatpush1.bf16.msra.mxu0 %v847
          %866 = vmatprep.subr.bf16.mxu0 0
          %867 = vmatpush1.bf16.msra.mxu0 %v848
          %868 = vmatprep.subr.bf16.mxu0 0
          %869 = vmatpush1.bf16.msra.mxu0 %v849
          %870 = vmatprep.subr.bf16.mxu0 0
          %871 = vmatpush1.bf16.msra.mxu0 %v850
          %872 = vmatprep.subr.bf16.mxu0 0
          %873 = vmatpush1.bf16.msra.mxu0 %v851
          %874 = vmatprep.subr.bf16.mxu0 0
          %875 = vmatpush1.bf16.msra.mxu0 %v852
          %876 = vmatprep.subr.bf16.mxu0 0
          %877 = vmatpush1.bf16.msra.mxu0 %v853
          %878 = vmatprep.subr.bf16.mxu0 0
          %879 = vmatpush1.bf16.msra.mxu0 0
          %880 = vmatprep.subr.bf16.mxu0 0
          %881 = vmatpush1.bf16.msra.mxu0 0
          %882 = vmatprep.subr.bf16.mxu0 0
          %883 = vmatpush1.bf16.msra.mxu0 0
          %884 = vmatprep.subr.bf16.mxu0 0
          %885 = vmatpush1.bf16.msra.mxu0 0
          %886 = vmatprep.subr.bf16.mxu0 0
          %887 = vmatpush1.bf16.msra.mxu0 0
          %888 = vmatprep.subr.bf16.mxu0 0
          %889 = vmatpush1.bf16.msra.mxu0 0
          %890 = vmatprep.subr.bf16.mxu0 0
          %891 = vmatpush1.bf16.msra.mxu0 0
          %892 = vmatprep.subr.bf16.mxu0 0
          %893 = vmatpush1.bf16.msra.mxu0 0
          %894 = vmatprep.mubr.bf16.mxu0 0
          %895 = vmatmul.mubr.bf16.gmra.mrb[0].mxu0 %v798
          %v896 = vpop.f32.mrb[0].mxu0
          %v897 = vadd.f32 0.0, %v896
          %v898 = vpop.f32.mrb[0].mxu0
          %v899 = vpop.f32.mrb[0].mxu0
          %v900 = vadd.f32 0.0, %v899
          %v901 = vpop.f32.mrb[0].mxu0
          %902 = vmatprep.mubr.bf16.mxu0 0
          %903 = vmatmul.mubr.bf16.gmra.mrb[0].mxu0 %v799
          %v904 = vpop.f32.mrb[0].mxu0
          %v905 = vadd.f32 0.0, %v904
          %v906 = vpop.f32.mrb[0].mxu0
          %v907 = vpop.f32.mrb[0].mxu0
          %v908 = vadd.f32 0.0, %v907
          %v909 = vpop.f32.mrb[0].mxu0
          %910 = vmatprep.mubr.bf16.mxu0 0
          %911 = vmatmul.mubr.bf16.gmra.mrb[0].mxu0 %v800
          %v912 = vpop.f32.mrb[0].mxu0
          %v913 = vadd.f32 0.0, %v912
          %v914 = vpop.f32.mrb[0].mxu0
          %v915 = vpop.f32.mrb[0].mxu0
          %v916 = vadd.f32 0.0, %v915
          %v917 = vpop.f32.mrb[0].mxu0
          %918 = vmatprep.mubr.bf16.mxu0 0
          %919 = vmatmul.mubr.bf16.gmra.mrb[0].mxu0 %v801
          %v920 = vpop.f32.mrb[0].mxu0
          %v921 = vadd.f32 0.0, %v920
          %v922 = vpop.f32.mrb[0].mxu0
          %v923 = vpop.f32.mrb[0].mxu0
          %v924 = vadd.f32 0.0, %v923
          %v925 = vpop.f32.mrb[0].mxu0
          %926 = vmatprep.mubr.bf16.mxu0 0
          %927 = vmatmul.mubr.bf16.gmra.mrb[0].mxu0 %v802
          %v928 = vpop.f32.mrb[0].mxu0
          %v929 = vadd.f32 0.0, %v928
          %v930 = vpop.f32.mrb[0].mxu0
          %v931 = vpop.f32.mrb[0].mxu0
          %v932 = vadd.f32 0.0, %v931
          %v933 = vpop.f32.mrb[0].mxu0
          %934 = vmatprep.mubr.bf16.mxu0 0
          %935 = vmatmul.mubr.bf16.gmra.mrb[0].mxu0 %v803
          %v936 = vpop.f32.mrb[0].mxu0
          %v937 = vadd.f32 0.0, %v936
          %v938 = vpop.f32.mrb[0].mxu0
          %v939 = vpop.f32.mrb[0].mxu0
          %v940 = vadd.f32 0.0, %v939
          %v941 = vpop.f32.mrb[0].mxu0
          %942 = vmatprep.mubr.bf16.mxu0 0
          %943 = vmatmul.mubr.bf16.gmra.mrb[0].mxu0 %v804
          %v944 = vpop.f32.mrb[0].mxu0
          %v945 = vadd.f32 0.0, %v944
          %v946 = vpop.f32.mrb[0].mxu0
          %v947 = vpop.f32.mrb[0].mxu0
          %v948 = vadd.f32 0.0, %v947
          %v949 = vpop.f32.mrb[0].mxu0
          %950 = vmatprep.mubr.bf16.mxu0 0
          %951 = vmatmul.mubr.bf16.gmra.mrb[0].mxu0 %v805
          %v952 = vpop.f32.mrb[0].mxu0
          %v953 = vadd.f32 0.0, %v952
          %v954 = vpop.f32.mrb[0].mxu0
          %v955 = vpop.f32.mrb[0].mxu0
          %v956 = vadd.f32 0.0, %v955
          %v957 = vpop.f32.mrb[0].mxu0
          %958 = vdwg.mxu0
          %v975 = vunpack.c.l.b16 %v718
          %v976 = vunpack.c.l.b16 %v719
          %v977 = vunpack.c.l.b16 %v720
          %v978 = vunpack.c.l.b16 %v721
          %v979 = vunpack.c.l.b16 %v722
          %v980 = vunpack.c.l.b16 %v723
          %v981 = vunpack.c.l.b16 %v724
          %v982 = vunpack.c.l.b16 %v725
          %v983 = vunpack.c.l.b16 %v726
          %v984 = vunpack.c.l.b16 %v727
          %v985 = vunpack.c.l.b16 %v728
          %v986 = vunpack.c.l.b16 %v729
          %v987 = vunpack.c.l.b16 %v730
          %v988 = vunpack.c.l.b16 %v731
          %v989 = vunpack.c.l.b16 %v732
          %v990 = vunpack.c.l.b16 %v733
          %v991 = vpack.c.b16 %v976, %v975
          %v992 = vpack.c.b16 %v978, %v977
          %v993 = vpack.c.b16 %v980, %v979
          %v994 = vpack.c.b16 %v982, %v981
          %v995 = vpack.c.b16 %v984, %v983
          %v996 = vpack.c.b16 %v986, %v985
          %v997 = vpack.c.b16 %v988, %v987
          %v998 = vpack.c.b16 %v990, %v989
          %1007 = vmatprep.subr.bf16.mxu0 0
          %1008 = vmatpush1.bf16.msra.mxu0 %v991
          %1009 = vmatprep.subr.bf16.mxu0 0
          %1010 = vmatpush1.bf16.msra.mxu0 %v992
          %1011 = vmatprep.subr.bf16.mxu0 0
          %1012 = vmatpush1.bf16.msra.mxu0 %v993
          %1013 = vmatprep.subr.bf16.mxu0 0
          %1014 = vmatpush1.bf16.msra.mxu0 %v994
          %1015 = vmatprep.subr.bf16.mxu0 0
          %1016 = vmatpush1.bf16.msra.mxu0 %v995
          %1017 = vmatprep.subr.bf16.mxu0 0
          %1018 = vmatpush1.bf16.msra.mxu0 %v996
          %1019 = vmatprep.subr.bf16.mxu0 0
          %1020 = vmatpush1.bf16.msra.mxu0 %v997
          %1021 = vmatprep.subr.bf16.mxu0 0
          %1022 = vmatpush1.bf16.msra.mxu0 %v998
          %1023 = vmatprep.subr.bf16.mxu0 0
          %1024 = vmatpush1.bf16.msra.mxu0 0
          %1025 = vmatprep.subr.bf16.mxu0 0
          %1026 = vmatpush1.bf16.msra.mxu0 0
          %1027 = vmatprep.subr.bf16.mxu0 0
          %1028 = vmatpush1.bf16.msra.mxu0 0
          %1029 = vmatprep.subr.bf16.mxu0 0
          %1030 = vmatpush1.bf16.msra.mxu0 0
          %1031 = vmatprep.subr.bf16.mxu0 0
          %1032 = vmatpush1.bf16.msra.mxu0 0
          %1033 = vmatprep.subr.bf16.mxu0 0
          %1034 = vmatpush1.bf16.msra.mxu0 0
          %1035 = vmatprep.subr.bf16.mxu0 0
          %1036 = vmatpush1.bf16.msra.mxu0 0
          %1037 = vmatprep.subr.bf16.mxu0 0
          %1038 = vmatpush1.bf16.msra.mxu0 0
          %1039 = vmatprep.mubr.bf16.mxu0 0
          %1040 = vmatmul.mubr.bf16.gmra.mrb[0].mxu0 %v710
          %v1041 = vpop.f32.mrb[0].mxu0
          %v1042 = vadd.f32 %v897, %v1041
          %v1043 = vpop.f32.mrb[0].mxu0
          %v1044 = vpop.f32.mrb[0].mxu0
          %v1045 = vadd.f32 %v900, %v1044
          %v1046 = vpop.f32.mrb[0].mxu0
          %1047 = vmatprep.mubr.bf16.mxu0 0
          %1048 = vmatmul.mubr.bf16.gmra.mrb[0].mxu0 %v711
          %v1049 = vpop.f32.mrb[0].mxu0
          %v1050 = vadd.f32 %v905, %v1049
          %v1051 = vpop.f32.mrb[0].mxu0
          %v1052 = vpop.f32.mrb[0].mxu0
          %v1053 = vadd.f32 %v908, %v1052
          %v1054 = vpop.f32.mrb[0].mxu0
          %1055 = vmatprep.mubr.bf16.mxu0 0
          %1056 = vmatmul.mubr.bf16.gmra.mrb[0].mxu0 %v712
          %v1057 = vpop.f32.mrb[0].mxu0
          %v1058 = vadd.f32 %v913, %v1057
          %v1059 = vpop.f32.mrb[0].mxu0
          %v1060 = vpop.f32.mrb[0].mxu0
          %v1061 = vadd.f32 %v916, %v1060
          %v1062 = vpop.f32.mrb[0].mxu0
          %1063 = vmatprep.mubr.bf16.mxu0 0
          %1064 = vmatmul.mubr.bf16.gmra.mrb[0].mxu0 %v713
          %v1065 = vpop.f32.mrb[0].mxu0
          %v1066 = vadd.f32 %v921, %v1065
          %v1067 = vpop.f32.mrb[0].mxu0
          %v1068 = vpop.f32.mrb[0].mxu0
          %v1069 = vadd.f32 %v924, %v1068
          %v1070 = vpop.f32.mrb[0].mxu0
          %1071 = vmatprep.mubr.bf16.mxu0 0
          %1072 = vmatmul.mubr.bf16.gmra.mrb[0].mxu0 %v714
          %v1073 = vpop.f32.mrb[0].mxu0
          %v1074 = vadd.f32 %v929, %v1073
          %v1075 = vpop.f32.mrb[0].mxu0
          %v1076 = vpop.f32.mrb[0].mxu0
          %v1077 = vadd.f32 %v932, %v1076
          %v1078 = vpop.f32.mrb[0].mxu0
          %1079 = vmatprep.mubr.bf16.mxu0 0
          %1080 = vmatmul.mubr.bf16.gmra.mrb[0].mxu0 %v715
          %v1081 = vpop.f32.mrb[0].mxu0
          %v1082 = vadd.f32 %v937, %v1081
          %v1083 = vpop.f32.mrb[0].mxu0
          %v1084 = vpop.f32.mrb[0].mxu0
          %v1085 = vadd.f32 %v940, %v1084
          %v1086 = vpop.f32.mrb[0].mxu0
          %1087 = vmatprep.mubr.bf16.mxu0 0
          %1088 = vmatmul.mubr.bf16.gmra.mrb[0].mxu0 %v716
          %v1089 = vpop.f32.mrb[0].mxu0
          %v1090 = vadd.f32 %v945, %v1089
          %v1091 = vpop.f32.mrb[0].mxu0
          %v1092 = vpop.f32.mrb[0].mxu0
          %v1093 = vadd.f32 %v948, %v1092
          %v1094 = vpop.f32.mrb[0].mxu0
          %1095 = vmatprep.mubr.bf16.mxu0 0
          %1096 = vmatmul.mubr.bf16.gmra.mrb[0].mxu0 %v717
          %v1097 = vpop.f32.mrb[0].mxu0
          %v1098 = vadd.f32 %v953, %v1097
          %v1099 = vpop.f32.mrb[0].mxu0
          %v1100 = vpop.f32.mrb[0].mxu0
          %v1101 = vadd.f32 %v956, %v1100
          %v1102 = vpop.f32.mrb[0].mxu0
          %1103 = vdwg.mxu0
          %v1104 = vld [vmem:[%s5] sm:$0x1]
          %v1106 = vlaneseq
          %v1107 = vshrl.u32 %v1106, 7
          %v1108 = vsub.s32 0, %v1107
          %v1109 = vrot.slane %v1104, %v1108
          %v1111 = vadd.f32 %v1042, %v1109
          %v1112 = vadd.f32 %v1045, %v1109
          %v1113 = vadd.f32 %v1050, %v1109
          %v1114 = vadd.f32 %v1053, %v1109
          %v1115 = vadd.f32 %v1058, %v1109
          %v1116 = vadd.f32 %v1061, %v1109
          %v1117 = vadd.f32 %v1066, %v1109
          %v1118 = vadd.f32 %v1069, %v1109
          %v1119 = vadd.f32 %v1074, %v1109
          %v1120 = vadd.f32 %v1077, %v1109
          %v1121 = vadd.f32 %v1082, %v1109
          %v1122 = vadd.f32 %v1085, %v1109
          %v1123 = vadd.f32 %v1090, %v1109
          %v1124 = vadd.f32 %v1093, %v1109
          %v1125 = vadd.f32 %v1098, %v1109
          %v1126 = vadd.f32 %v1101, %v1109
          %v1127 = vmax.f32 %v1111, 0.0
          %v1128 = vmax.f32 %v1112, 0.0
          %v1129 = vmax.f32 %v1113, 0.0
          %v1130 = vmax.f32 %v1114, 0.0
          %v1131 = vmax.f32 %v1115, 0.0
          %v1132 = vmax.f32 %v1116, 0.0
          %v1133 = vmax.f32 %v1117, 0.0
          %v1134 = vmax.f32 %v1118, 0.0
          %v1135 = vmax.f32 %v1119, 0.0
          %v1136 = vmax.f32 %v1120, 0.0
          %v1137 = vmax.f32 %v1121, 0.0
          %v1138 = vmax.f32 %v1122, 0.0
          %v1139 = vmax.f32 %v1123, 0.0
          %v1140 = vmax.f32 %v1124, 0.0
          %v1141 = vmax.f32 %v1125, 0.0
          %v1142 = vmax.f32 %v1126, 0.0
          %v1143 = vpack.c.bf16 %v1128, %v1127
          %v1144 = vpack.c.bf16 %v1130, %v1129
          %v1145 = vpack.c.bf16 %v1132, %v1131
          %v1146 = vpack.c.bf16 %v1134, %v1133
          %v1147 = vpack.c.bf16 %v1136, %v1135
          %v1148 = vpack.c.bf16 %v1138, %v1137
          %v1149 = vpack.c.bf16 %v1140, %v1139
          %v1150 = vpack.c.bf16 %v1142, %v1141
          %v1159 = vunpack.c.l.b16 %v1143
          %v1160 = vunpack.c.h.b16 %v1143
          %v1161 = vunpack.c.l.b16 %v1144
          %v1162 = vunpack.c.h.b16 %v1144
          %v1163 = vunpack.c.l.b16 %v1145
          %v1164 = vunpack.c.h.b16 %v1145
          %v1165 = vunpack.c.l.b16 %v1146
          %v1166 = vunpack.c.h.b16 %v1146
          %v1167 = vunpack.c.l.b16 %v1147
          %v1168 = vunpack.c.h.b16 %v1147
          %v1169 = vunpack.c.l.b16 %v1148
          %v1170 = vunpack.c.h.b16 %v1148
          %v1171 = vunpack.c.l.b16 %v1149
          %v1172 = vunpack.c.h.b16 %v1149
          %v1173 = vunpack.c.l.b16 %v1150
          %v1174 = vunpack.c.h.b16 %v1150
          %v1175 = vpack.c.b16 %v1159, %v1159
          %v1176 = vpack.c.b16 %v1160, %v1160
          %v1177 = vpack.c.b16 %v1161, %v1161
          %v1178 = vpack.c.b16 %v1162, %v1162
          %v1179 = vpack.c.b16 %v1163, %v1163
          %v1180 = vpack.c.b16 %v1164, %v1164
          %v1181 = vpack.c.b16 %v1165, %v1165
          %v1182 = vpack.c.b16 %v1166, %v1166
          %v1183 = vpack.c.b16 %v1167, %v1167
          %v1184 = vpack.c.b16 %v1168, %v1168
          %v1185 = vpack.c.b16 %v1169, %v1169
          %v1186 = vpack.c.b16 %v1170, %v1170
          %v1187 = vpack.c.b16 %v1171, %v1171
          %v1188 = vpack.c.b16 %v1172, %v1172
          %v1189 = vpack.c.b16 %v1173, %v1173
          %v1190 = vpack.c.b16 %v1174, %v1174
          %1207 = vst [vmem:[%s391] sm:$0xf] %v1175
          %1208 = vst [vmem:[%s391 + $0x4] sm:$0xf] %v1176
          %1209 = vst [vmem:[%s391 + $0x8] sm:$0xf] %v1177
          %1210 = vst [vmem:[%s391 + $0xc] sm:$0xf] %v1178
          %1211 = vst [vmem:[%s391 + $0x10] sm:$0xf] %v1179
          %1212 = vst [vmem:[%s391 + $0x14] sm:$0xf] %v1180
          %1213 = vst [vmem:[%s391 + $0x18] sm:$0xf] %v1181
          %1214 = vst [vmem:[%s391 + $0x1c] sm:$0xf] %v1182
          %1215 = vst [vmem:[%s391 + $0x20] sm:$0xf] %v1183
          %1216 = vst [vmem:[%s391 + $0x24] sm:$0xf] %v1184
          %1217 = vst [vmem:[%s391 + $0x28] sm:$0xf] %v1185
          %1218 = vst [vmem:[%s391 + $0x2c] sm:$0xf] %v1186
          %1219 = vst [vmem:[%s391 + $0x30] sm:$0xf] %v1187
          %1220 = vst [vmem:[%s391 + $0x34] sm:$0xf] %v1188
          %1221 = vst [vmem:[%s391 + $0x38] sm:$0xf] %v1189
          %1222 = vst [vmem:[%s391 + $0x3c] sm:$0xf] %v1190
        $region72: #{tpu_custom_call.1} parent=43 // pred_fallthru
          _
        %s1223 = sand.u32 %s190, 1
        %s1224 = scalar_lea.sflag [#allocation5], %s1223
        %s1225 = sand.u32 %s190, 1
        %s1226 = smul.addr %s1225, 64
        %s1227 = scalar_lea.vmem [#allocation12], %s1226
        // Predicated region
        $region73: #{tpu_custom_call.1} parent=43 // pred_check
          %p1228 = pneg %p200
        $region74: #{tpu_custom_call.1} parent=43 // pred_check_branch
          %1230 = sbr.rel (%p1228) target = $region76
        $region75: #{tpu_custom_call.1} parent=43 // pred_region
          %s1231 = smul.u32 16, %s31
          %s1233 = ssub.s32 1024, 1024
          %1234 = vsyncadd %s1224, %s1233
          %s1235 = smul.addr %s1231, 64
          %s1236 = scalar_lea.hbm %s6, %s1235
          %s1237 = sshll.u32 %s1227, 4
          %s1238 = int_to_ptr.vmem [resolvable:$true] %s1237
          %1243 = dma.vmem_to_hbm [thread:$0]  %s1238, 1024, %s1236, %s1224, 64, 64, 4
        $region76: #{tpu_custom_call.1} parent=43 // pred_fallthru
          _
      $region44: #{tpu_custom_call.1} parent=5 // pred_fallthru
        _
      %p1244 = scmp.le.s32.totalorder 2, %s22
      // Predicated region
      $region77: #{tpu_custom_call.1} parent=5 // pred_check
        %p1245 = pneg %p1244
      $region78: #{tpu_custom_call.1} parent=5 // pred_check_branch
        %1247 = sbr.rel (%p1245) target = $region80
      $region79: #{tpu_custom_call.1} parent=5 // pred_region
        %s1248 = ssub.s32 %s22, 2
        // Predicated region
        $region81: #{tpu_custom_call.1} parent=79 // pred_check
          %p1249 = pneg %p206
        $region82: #{tpu_custom_call.1} parent=79 // pred_check_branch
          %1251 = sbr.rel (%p1249) target = $region84
        $region83: #{tpu_custom_call.1} parent=79 // pred_region
          %s1252 = sand.u32 %s191, 1
          %s1253 = scalar_lea.sflag [#allocation5], %s1252
          %s1254 = sand.u32 %s191, 1
          %s1255 = smul.addr %s1254, 64
          %s1256 = scalar_lea.vmem [#allocation12], %s1255
          %1257 = dma.done %s1253, 1024
        $region84: #{tpu_custom_call.1} parent=79 // pred_fallthru
          _
      $region80: #{tpu_custom_call.1} parent=5 // pred_fallthru
        _
    $region6: #{tpu_custom_call.1} parent=1 // loop_footer
      %s26 = sadd.s32 1, %s22
    $region7: #{tpu_custom_call.1} parent=1 // loop_footer_branch
      %21 = sbr.rel target = $region3
    $region8: #{tpu_custom_call.1} parent=1 // loop_exit
      _
    %1258 = vsyncpa [#allocation4], 1
    %s1259 = scalar_lea.sflag [#allocation4], 1
    %1260 = vsyncpa %s1259, 1
    %1261 = vsyncpa [#allocation7], 1
    %s1262 = scalar_lea.sflag [#allocation7], 1
    %1263 = vsyncpa %s1262, 1
    %1264 = vsyncpa [#allocation10], 1
    %1265 = vsyncpa [#allocation5], 1
    %s1266 = scalar_lea.sflag [#allocation5], 1
    %1267 = vsyncpa %s1266, 1

</llo_original>
